<compile_context>
chip_gen: v7x
topology: tpu7x:2x2x1
jax: 0.10.0
libtpu: 0.0.40
codegen_flags: <defaults>
</compile_context>

<pallas_src>
import functools

import jax
import jax.numpy as jnp
from jax.experimental import pallas as pl
from jax.experimental.pallas import tpu as pltpu

LANE = 128
SUBLANE = 8
_MIN_MEGACORE_TILE = 256   # rows per TensorCore below which splitting is waste


def _round_up(x, m):
    return ((x + m - 1) // m) * m


def _cdiv(a, b):
    return -(-a // b)


def _pick_tile(N, tile_n):
    """Balanced row tile: minimal padding waste, >=2 steps when worthwhile."""
    Nr = _round_up(max(N, 1), SUBLANE)
    steps = _cdiv(Nr, tile_n)
    # Feed both v7x TensorCores whenever there is enough work for two tiles.
    if steps == 1 and Nr >= 2 * _MIN_MEGACORE_TILE:
        steps = 2
    tile = _round_up(_cdiv(Nr, steps), SUBLANE)
    return tile, _round_up(Nr, tile)


# ----------------------------------------------------------------------------
# Kernel bodies
# ----------------------------------------------------------------------------
def _agent_compute(x, h0, w1_ref, b1_ref, wgx_ref, wgh_ref, bg_ref,
                   w2_ref, b2_ref):
    """fc1+ReLU -> GRUCell -> fc2 on one (tile, *) row block.

    MXU operands are in the storage dtype (f32 or bf16); accumulation and all
    gate math are f32."""
    Hp = h0.shape[-1]
    cdt = w1_ref.dtype

    # fc1 + ReLU.
    x1 = jnp.dot(x.astype(cdt), w1_ref[...], preferred_element_type=jnp.float32)
    x1 = jnp.maximum(x1 + b1_ref[...], 0.0)

    # GRU pre-activations as two accumulating matmuls (no [x1|h0] concat copy):
    #   g = x1 @ Wg_x + h0 @ Wg_h + bg,  columns = [r | z | i_n | h_n], each Hp.
    g = jnp.dot(x1.astype(cdt), wgx_ref[...], preferred_element_type=jnp.float32)
    g = g + jnp.dot(h0, wgh_ref[...], preferred_element_type=jnp.float32)
    g = g + bg_ref[...]

    h0f = h0.astype(jnp.float32)
    r = jax.nn.sigmoid(g[:, 0:Hp])
    z = jax.nn.sigmoid(g[:, Hp:2 * Hp])
    n = jnp.tanh(g[:, 2 * Hp:3 * Hp] + r * g[:, 3 * Hp:4 * Hp])
    # h' = (1-z)*n + z*h0, one fewer multiply.  Padded lanes: n == h0 == 0
    # there, so h' stays exactly 0 (invariant needed by the padded-state API).
    h_new = n + z * (h0f - n)

    # fc2 (lane-dense padded output Ap).
    q = jnp.dot(h_new.astype(cdt), w2_ref[...],
                preferred_element_type=jnp.float32)
    q = q + b2_ref[...]
    return q, h_new


def _inspire_kernel(x_ref, h0_ref, w1_ref, b1_ref, wgx_ref, wgh_ref, bg_ref,
                    w2_ref, b2_ref, q_ref, h_ref):
    q, h_new = _agent_compute(x_ref[...], h0_ref[...], w1_ref, b1_ref,
                              wgx_ref, wgh_ref, bg_ref, w2_ref, b2_ref)
    q_ref[...] = q.astype(q_ref.dtype)
    h_ref[...] = h_new.astype(h_ref.dtype)


def _inspire_kernel_score(x_ref, s_ref, h0_ref, w1_ref, b1_ref, wgx_ref,
                          wgh_ref, bg_ref, w2_ref, b2_ref, q_ref, h_ref):
    # inputs * score.unsqueeze(2); multiply done in f32 (score stays f32).
    x = x_ref[...].astype(jnp.float32) * s_ref[...]
    q, h_new = _agent_compute(x, h0_ref[...], w1_ref, b1_ref,
                              wgx_ref, wgh_ref, bg_ref, w2_ref, b2_ref)
    q_ref[...] = q.astype(q_ref.dtype)
    h_ref[...] = h_new.astype(h_ref.dtype)


# ----------------------------------------------------------------------------
# Wrapper: balanced row tiling, resident weights, padded-state API.
# ----------------------------------------------------------------------------
@functools.partial(jax.jit,
                   static_argnames=("H", "A", "tile_n", "padded_hidden_out"))
def inspire_rnn_agent_forward(inputs, hidden_state, packed, *, H, A,
                              score=None, tile_n=1024,
                              padded_hidden_out=False):
    """inputs: (b, a, E).

    hidden_state: None, (b*a, H), (b, a, H), or the padded kernel layout
    (Np, Hp) returned by a previous call with padded_hidden_out=True.
    Returns (q: (b, a, A), h), where h is (Np, Hp) if padded_hidden_out else
    (b, a, H)."""
    b, a, e = inputs.shape
    N = b * a
    dt = packed["w1"].dtype
    Hp = packed["w1"].shape[1]
    Gw = packed["wgx"].shape[1]          # 4 * Hp
    Ap = packed["w2"].shape[1]

    tile, Np = _pick_tile(N, tile_n)

    x2d = inputs.reshape(N, e).astype(dt)
    if Np != N:
        x2d = jnp.pad(x2d, ((0, Np - N), (0, 0)))

    if hidden_state is None:
        h0p = jnp.zeros((Np, Hp), dt)
    elif hidden_state.ndim == 2 and hidden_state.shape == (Np, Hp):
        h0p = hidden_state.astype(dt)    # already in the kernel layout
    else:
        h0 = hidden_state.reshape(N, -1)[:, :H].astype(dt)
        h0p = jnp.zeros((Np, Hp), dt).at[:N, :H].set(h0)

    def row_spec(width):
        return pl.BlockSpec((tile, width), lambda i: (i, 0))

    def resident_spec(rows, cols):
        # Constant block; single VMEM buffer (no pointless double-buffer).
        return pl.BlockSpec((rows, cols), lambda i: (0, 0),
                            pipeline_mode=pl.Buffered(1))

    in_specs = [row_spec(e)]
    args = [x2d]
    if score is not None:
        s2d = score.reshape(N, 1).astype(jnp.float32)
        if Np != N:
            s2d = jnp.pad(s2d, ((0, Np - N), (0, 0)))
        in_specs.append(row_spec(1))
        args.append(s2d)

    h0_arg_idx = len(args)                 # alias old hidden -> new hidden
    in_specs += [
        row_spec(Hp),
        resident_spec(e, Hp), resident_spec(1, Hp),
        resident_spec(Hp, Gw), resident_spec(Hp, Gw), resident_spec(1, Gw),
        resident_spec(Hp, Ap), resident_spec(1, Ap),
    ]
    args += [h0p, packed["w1"], packed["b1"], packed["wgx"], packed["wgh"],
             packed["bg"], packed["w2"], packed["b2"]]

    kernel = _inspire_kernel if score is None else _inspire_kernel_score

    itemsize = jnp.dtype(dt).itemsize
    w_elems = e * Hp + 2 * Hp * Gw + Hp * Ap
    cost = pl.CostEstimate(
        flops=2 * Np * w_elems,
        transcendentals=3 * Np * Hp,
        bytes_accessed=itemsize * (Np * (e + 2 * Hp + Ap) + w_elems),
    )

    # VMEM budget: single-buffered weights + double-buffered activation tiles
    # + generous allowance for f32 temporaries; capped for v7x's 64 MiB VMEM.
    w_bytes = w_elems * itemsize + 4 * (Hp + Gw + Ap)
    io_bytes = 2 * tile * (e + 1 + Hp + Hp + Ap) * itemsize
    tmp_bytes = 4 * tile * (2 * Hp + Gw + Ap) * 4
    vmem_limit = int(min(64 << 20,
                         max(32 << 20, 2 * (w_bytes + io_bytes + tmp_bytes))))

    q2d, h2d = pl.pallas_call(
        kernel,
        grid=(Np // tile,),
        in_specs=in_specs,
        out_specs=(row_spec(Ap), row_spec(Hp)),
        out_shape=(jax.ShapeDtypeStruct((Np, Ap), dt),
                   jax.ShapeDtypeStruct((Np, Hp), dt)),
        input_output_aliases={h0_arg_idx: 1},
        compiler_params=pltpu.CompilerParams(
            dimension_semantics=("parallel",),
            vmem_limit_bytes=vmem_limit),
        cost_estimate=cost,
    )(*args)

    q = q2d[:N, :A].reshape(b, a, A)
    if padded_hidden_out:
        return q, h2d                       # (Np, Hp) kernel-layout state
    return q, h2d[:N, :H].reshape(b, a, H)


# ----------------------------------------------------------------------------
# Parameters: PyTorch-style init (unpadded) + packing into the kernel layout.
# ----------------------------------------------------------------------------
def init_params(key, input_shape, rnn_hidden_dim, n_actions):
    """Unpadded params; weights stored transposed (in, out) vs PyTorch."""
    E, H, A = input_shape, rnn_hidden_dim, n_actions
    ks = jax.random.split(key, 8)

    def u(k, shape, fan_in):
        bound = 1.0 / (fan_in ** 0.5)
        return jax.random.uniform(k, shape, jnp.float32, -bound, bound)

    return {
        "w1": u(ks[0], (E, H), E), "b1": u(ks[1], (H,), E),
        "wih": u(ks[2], (H, 3 * H), H), "whh": u(ks[3], (H, 3 * H), H),
        "bih": u(ks[4], (3 * H,), H), "bhh": u(ks[5], (3 * H,), H),
        "w2": u(ks[6], (H, A), H), "b2": u(ks[7], (A,), H),
    }


def pack_params(p, dtype=jnp.bfloat16):
    """Pad H->Hp, A->Ap (multiples of 128); split GRU weights into x/h paths.

    Gate columns are [r | z | i_n | h_n], each Hp wide.  Padded weight/bias
    entries are zero so numerics are exact; biases stay f32."""
    E, H = p["w1"].shape
    A = p["w2"].shape[1]
    Hp = _round_up(H, LANE)
    Ap = _round_up(A, LANE)
    Gw = 4 * Hp

    w1 = jnp.zeros((E, Hp), dtype).at[:, :H].set(p["w1"].astype(dtype))
    b1 = jnp.zeros((1, Hp), jnp.float32).at[0, :H].set(p["b1"])

    wih = p["wih"].astype(dtype)
    whh = p["whh"].astype(dtype)
    wgx = jnp.zeros((Hp, Gw), dtype)
    wgx = wgx.at[:H, 0:H].set(wih[:, 0:H])                       # x -> r
    wgx = wgx.at[:H, Hp:Hp + H].set(wih[:, H:2 * H])             # x -> z
    wgx = wgx.at[:H, 2 * Hp:2 * Hp + H].set(wih[:, 2 * H:])      # x -> i_n
    wgh = jnp.zeros((Hp, Gw), dtype)
    wgh = wgh.at[:H, 0:H].set(whh[:, 0:H])                       # h -> r
    wgh = wgh.at[:H, Hp:Hp + H].set(whh[:, H:2 * H])             # h -> z
    wgh = wgh.at[:H, 3 * Hp:3 * Hp + H].set(whh[:, 2 * H:])      # h -> h_n

    bg = jnp.zeros((1, Gw), jnp.float32)
    bg = bg.at[0, 0:H].set(p["bih"][0:H] + p["bhh"][0:H])
    bg = bg.at[0, Hp:Hp + H].set(p["bih"][H:2 * H] + p["bhh"][H:2 * H])
    bg = bg.at[0, 2 * Hp:2 * Hp + H].set(p["bih"][2 * H:])
    bg = bg.at[0, 3 * Hp:3 * Hp + H].set(p["bhh"][2 * H:])

    w2 = jnp.zeros((Hp, Ap), dtype).at[:H, :A].set(p["w2"].astype(dtype))
    b2 = jnp.zeros((1, Ap), jnp.float32).at[0, :A].set(p["b2"])

    return {"w1": w1, "b1": b1, "wgx": wgx, "wgh": wgh, "bg": bg,
            "w2": w2, "b2": b2}


# ----------------------------------------------------------------------------
# Pure-JAX reference (unpadded, f32) for correctness checks.
# ----------------------------------------------------------------------------
def reference_forward(inputs, hidden_state, p, score=None):
    b, a, e = inputs.shape
    H = p["w1"].shape[1]
    x = inputs
    if score is not None:
        x = x * score[..., None]
    x = x.reshape(-1, e)
    if hidden_state is None:
        h0 = jnp.zeros((x.shape[0], H), jnp.float32)
    else:
        h0 = hidden_state.reshape(-1, H)
    x1 = jax.nn.relu(x @ p["w1"] + p["b1"])
    gi = x1 @ p["wih"] + p["bih"]
    gh = h0 @ p["whh"] + p["bhh"]
    r = jax.nn.sigmoid(gi[:, :H] + gh[:, :H])
    z = jax.nn.sigmoid(gi[:, H:2 * H] + gh[:, H:2 * H])
    n = jnp.tanh(gi[:, 2 * H:] + r * gh[:, 2 * H:])
    h = (1.0 - z) * n + z * h0
    q = h @ p["w2"] + p["b2"]
    return q.reshape(b, a, -1), h.reshape(b, a, -1)


if __name__ == "__main__":
    # Small shapes: batch=2, agents=4, input_shape=32, hidden=32, n_actions=8
    b, a, e = 2, 4, 32
    H, A = 32, 8

    key = jax.random.PRNGKey(0)
    k_in, k_p, k_s, k_in2, k_h2, k_t1, k_t2, k_t3 = jax.random.split(key, 8)

    inputs = jax.random.normal(k_in, (b, a, e), jnp.float32)
    hidden0 = jnp.zeros((b * a, H), jnp.float32)          # init_hidden()
    score = jax.random.uniform(k_s, (b, a), jnp.float32)

    raw = init_params(k_p, e, H, A)
    packed_bf16 = pack_params(raw)                        # bf16 (default)
    packed_f32 = pack_params(raw, jnp.float32)

    q_ref, h_ref = reference_forward(inputs, hidden0, raw)

    # --- f32 packing, plain forward ---
    q, h = inspire_rnn_agent_forward(inputs, hidden0, packed_f32, H=H, A=A)
    q, h = jax.block_until_ready((q, h))
    assert q.shape == (b, a, A) and h.shape == (b, a, H)
    assert jnp.allclose(q, q_ref, atol=2e-3, rtol=2e-3)
    assert jnp.allclose(h, h_ref, atol=2e-3, rtol=2e-3)

    # --- bf16 storage (default), plain forward ---
    qb, hb = inspire_rnn_agent_forward(inputs, hidden0, packed_bf16, H=H, A=A)
    qb, hb = jax.block_until_ready((qb, hb))
    assert jnp.allclose(qb.astype(jnp.float32), q_ref, atol=5e-2, rtol=5e-2)
    assert jnp.allclose(hb.astype(jnp.float32), h_ref, atol=5e-2, rtol=5e-2)

    # --- forward_score, f32 and bf16 ---
    qs_ref, hs_ref = reference_forward(inputs, hidden0, raw, score=score)
    qs, hs = inspire_rnn_agent_forward(inputs, hidden0, packed_f32,
                                       H=H, A=A, score=score)
    qs, hs = jax.block_until_ready((qs, hs))
    assert jnp.allclose(qs, qs_ref, atol=2e-3, rtol=2e-3)
    assert jnp.allclose(hs, hs_ref, atol=2e-3, rtol=2e-3)
    qsb, hsb = inspire_rnn_agent_forward(inputs, hidden0, packed_bf16,
                                         H=H, A=A, score=score)
    qsb, hsb = jax.block_until_ready((qsb, hsb))
    assert jnp.allclose(qsb.astype(jnp.float32), qs_ref, atol=5e-2, rtol=5e-2)
    assert jnp.allclose(hsb.astype(jnp.float32), hs_ref, atol=5e-2, rtol=5e-2)

    # --- multi-step recurrence keeping the hidden state in the padded kernel
    #     layout between calls (no per-step pad/slice HBM passes) ---
    steps_in = [jax.random.normal(k, (b, a, e), jnp.float32)
                for k in (k_t1, k_t2, k_t3)]
    h_carry = None
    for t, xt in enumerate(steps_in):
        last = (t == len(steps_in) - 1)
        qt, h_carry = inspire_rnn_agent_forward(
            xt, h_carry, packed_f32, H=H, A=A, padded_hidden_out=not last)
    qt, h_last = jax.block_until_ready((qt, h_carry))
    h_ref_t = hidden0
    for xt in steps_in:
        q_ref_t, h_ref_t = reference_forward(xt, h_ref_t, raw)
        h_ref_t = h_ref_t.reshape(-1, H)
    assert jnp.allclose(qt, q_ref_t, atol=2e-3, rtol=2e-3)
    assert jnp.allclose(h_last, h_ref_t.reshape(b, a, H), atol=2e-3, rtol=2e-3)

    # --- larger N: balanced multi-tile grid + megacore split ---
    b2, a2 = 40, 16                                       # N = 640
    inputs2 = jax.random.normal(k_in2, (b2, a2, e), jnp.float32)
    hidden2 = 0.1 * jax.random.normal(k_h2, (b2 * a2, H), jnp.float32)
    q2_ref, h2_ref = reference_forward(inputs2, hidden2, raw)

    # default tile_n=1024 -> 2 balanced tiles of 320 rows (feeds both v7x TCs)
    q2, h2 = inspire_rnn_agent_forward(inputs2, hidden2, packed_f32, H=H, A=A)
    q2, h2 = jax.block_until_ready((q2, h2))
    assert jnp.allclose(q2, q2_ref, atol=2e-3, rtol=2e-3)
    assert jnp.allclose(h2, h2_ref, atol=2e-3, rtol=2e-3)

    # explicit small tile -> 3 balanced tiles of 216 rows (only 8 padded rows)
    q3, h3 = inspire_rnn_agent_forward(inputs2, hidden2, packed_f32,
                                       H=H, A=A, tile_n=256)
    q3, h3 = jax.block_until_ready((q3, h3))
    assert jnp.allclose(q3, q2_ref, atol=2e-3, rtol=2e-3)
    assert jnp.allclose(h3, h2_ref, atol=2e-3, rtol=2e-3)

    print("KERNEL_OK")
</pallas_src>

<mosaic_0001>
module attributes {stable_mosaic.version = 11 : i64} {
  func.func @_inspire_kernel(%arg0: i32, %arg1: memref<8x32xf32, #tpu.memory_space<vmem>>, %arg2: memref<8x128xf32, #tpu.memory_space<vmem>>, %arg3: memref<32x128xf32, #tpu.memory_space<vmem>>, %arg4: memref<1x128xf32, #tpu.memory_space<vmem>>, %arg5: memref<128x512xf32, #tpu.memory_space<vmem>>, %arg6: memref<128x512xf32, #tpu.memory_space<vmem>>, %arg7: memref<1x512xf32, #tpu.memory_space<vmem>>, %arg8: memref<128x128xf32, #tpu.memory_space<vmem>>, %arg9: memref<1x128xf32, #tpu.memory_space<vmem>>, %arg10: memref<8x128xf32, #tpu.memory_space<vmem>>, %arg11: memref<8x128xf32, #tpu.memory_space<vmem>>) attributes {dimension_semantics = [#tpu.dimension_semantics<parallel>], iteration_bounds = array<i64: 1>, scalar_prefetch = 0 : i64, scratch_operands = 0 : i64, tpu.core_type = #tpu.core_type<tc>, window_params = [{transform_indices = @transform_0, window_bounds = array<i64: 8, 32>}, {transform_indices = @transform_1, window_bounds = array<i64: 8, 128>}, {pipeline_mode = #tpu.pipeline_mode<synchronous>, transform_indices = @transform_2, window_bounds = array<i64: 32, 128>}, {pipeline_mode = #tpu.pipeline_mode<synchronous>, transform_indices = @transform_3, window_bounds = array<i64: 1, 128>}, {pipeline_mode = #tpu.pipeline_mode<synchronous>, transform_indices = @transform_4, window_bounds = array<i64: 128, 512>}, {pipeline_mode = #tpu.pipeline_mode<synchronous>, transform_indices = @transform_5, window_bounds = array<i64: 128, 512>}, {pipeline_mode = #tpu.pipeline_mode<synchronous>, transform_indices = @transform_6, window_bounds = array<i64: 1, 512>}, {pipeline_mode = #tpu.pipeline_mode<synchronous>, transform_indices = @transform_7, window_bounds = array<i64: 128, 128>}, {pipeline_mode = #tpu.pipeline_mode<synchronous>, transform_indices = @transform_8, window_bounds = array<i64: 1, 128>}, {transform_indices = @transform_9, window_bounds = array<i64: 8, 128>}, {transform_indices = @transform_10, window_bounds = array<i64: 8, 128>}]} {
    %c0 = arith.constant 0 : index
    %c0_0 = arith.constant 0 : index
    %0 = vector.load %arg1[%c0, %c0_0] : memref<8x32xf32, #tpu.memory_space<vmem>>, vector<8x32xf32>
    %c0_1 = arith.constant 0 : index
    %c0_2 = arith.constant 0 : index
    %1 = vector.load %arg2[%c0_1, %c0_2] : memref<8x128xf32, #tpu.memory_space<vmem>>, vector<8x128xf32>
    %c0_3 = arith.constant 0 : index
    %c0_4 = arith.constant 0 : index
    %2 = vector.load %arg3[%c0_3, %c0_4] : memref<32x128xf32, #tpu.memory_space<vmem>>, vector<32x128xf32>
    %cst = arith.constant dense<0.000000e+00> : vector<8x128xf32>
    %3 = tpu.matmul %0, %2, %cst {dimension_numbers = #tpu.dot_dimension_numbers<[1], [0], [0], [1], [0, 0, 1, 1], [], []>} : vector<8x32xf32>, vector<32x128xf32>, vector<8x128xf32> -> vector<8x128xf32>
    %c0_5 = arith.constant 0 : index
    %c0_6 = arith.constant 0 : index
    %4 = vector.load %arg4[%c0_5, %c0_6] : memref<1x128xf32, #tpu.memory_space<vmem>>, vector<1x128xf32>
    %5 = vector.broadcast %4 : vector<1x128xf32> to vector<8x128xf32>
    %6 = arith.addf %3, %5 : vector<8x128xf32>
    %cst_7 = arith.constant 0.000000e+00 : f32
    %7 = vector.broadcast %cst_7 : f32 to vector<8x128xf32>
    %8 = arith.maximumf %6, %7 : vector<8x128xf32>
    %c0_8 = arith.constant 0 : index
    %c0_9 = arith.constant 0 : index
    %9 = vector.load %arg5[%c0_8, %c0_9] : memref<128x512xf32, #tpu.memory_space<vmem>>, vector<128x512xf32>
    %cst_10 = arith.constant dense<0.000000e+00> : vector<8x512xf32>
    %10 = tpu.matmul %8, %9, %cst_10 {dimension_numbers = #tpu.dot_dimension_numbers<[1], [0], [0], [1], [0, 0, 1, 1], [], []>} : vector<8x128xf32>, vector<128x512xf32>, vector<8x512xf32> -> vector<8x512xf32>
    %c0_11 = arith.constant 0 : index
    %c0_12 = arith.constant 0 : index
    %11 = vector.load %arg6[%c0_11, %c0_12] : memref<128x512xf32, #tpu.memory_space<vmem>>, vector<128x512xf32>
    %cst_13 = arith.constant dense<0.000000e+00> : vector<8x512xf32>
    %12 = tpu.matmul %1, %11, %cst_13 {dimension_numbers = #tpu.dot_dimension_numbers<[1], [0], [0], [1], [0, 0, 1, 1], [], []>} : vector<8x128xf32>, vector<128x512xf32>, vector<8x512xf32> -> vector<8x512xf32>
    %13 = arith.addf %10, %12 : vector<8x512xf32>
    %c0_14 = arith.constant 0 : index
    %c0_15 = arith.constant 0 : index
    %14 = vector.load %arg7[%c0_14, %c0_15] : memref<1x512xf32, #tpu.memory_space<vmem>>, vector<1x512xf32>
    %15 = vector.broadcast %14 : vector<1x512xf32> to vector<8x512xf32>
    %16 = arith.addf %13, %15 : vector<8x512xf32>
    %17 = vector.extract_strided_slice %16 {offsets = [0, 0], sizes = [8, 128], strides = [1, 1]} : vector<8x512xf32> to vector<8x128xf32>
    %18 = arith.negf %17 : vector<8x128xf32>
    %19 = math.exp %18 : vector<8x128xf32>
    %cst_16 = arith.constant 1.000000e+00 : f32
    %20 = vector.broadcast %cst_16 : f32 to vector<8x128xf32>
    %21 = arith.addf %20, %19 : vector<8x128xf32>
    %22 = arith.divf %20, %21 : vector<8x128xf32>
    %23 = vector.extract_strided_slice %16 {offsets = [0, 128], sizes = [8, 128], strides = [1, 1]} : vector<8x512xf32> to vector<8x128xf32>
    %24 = arith.negf %23 : vector<8x128xf32>
    %25 = math.exp %24 : vector<8x128xf32>
    %cst_17 = arith.constant 1.000000e+00 : f32
    %26 = vector.broadcast %cst_17 : f32 to vector<8x128xf32>
    %27 = arith.addf %26, %25 : vector<8x128xf32>
    %28 = arith.divf %26, %27 : vector<8x128xf32>
    %29 = vector.extract_strided_slice %16 {offsets = [0, 256], sizes = [8, 128], strides = [1, 1]} : vector<8x512xf32> to vector<8x128xf32>
    %30 = vector.extract_strided_slice %16 {offsets = [0, 384], sizes = [8, 128], strides = [1, 1]} : vector<8x512xf32> to vector<8x128xf32>
    %31 = arith.mulf %22, %30 : vector<8x128xf32>
    %32 = arith.addf %29, %31 : vector<8x128xf32>
    %33 = math.tanh %32 : vector<8x128xf32>
    %34 = arith.subf %1, %33 : vector<8x128xf32>
    %35 = arith.mulf %28, %34 : vector<8x128xf32>
    %36 = arith.addf %33, %35 : vector<8x128xf32>
    %c0_18 = arith.constant 0 : index
    %c0_19 = arith.constant 0 : index
    %37 = vector.load %arg8[%c0_18, %c0_19] : memref<128x128xf32, #tpu.memory_space<vmem>>, vector<128x128xf32>
    %cst_20 = arith.constant dense<0.000000e+00> : vector<8x128xf32>
    %38 = tpu.matmul %36, %37, %cst_20 {dimension_numbers = #tpu.dot_dimension_numbers<[1], [0], [0], [1], [0, 0, 1, 1], [], []>} : vector<8x128xf32>, vector<128x128xf32>, vector<8x128xf32> -> vector<8x128xf32>
    %c0_21 = arith.constant 0 : index
    %c0_22 = arith.constant 0 : index
    %39 = vector.load %arg9[%c0_21, %c0_22] : memref<1x128xf32, #tpu.memory_space<vmem>>, vector<1x128xf32>
    %40 = vector.broadcast %39 : vector<1x128xf32> to vector<8x128xf32>
    %41 = arith.addf %38, %40 : vector<8x128xf32>
    %c0_23 = arith.constant 0 : index
    %c0_24 = arith.constant 0 : index
    %42 = vector.load %arg10[%c0_23, %c0_24] : memref<8x128xf32, #tpu.memory_space<vmem>>, vector<8x128xf32>
    tpu.vector_store %arg10[%c0_23, %c0_24], %41 {strides = array<i32>} : memref<8x128xf32, #tpu.memory_space<vmem>>, vector<8x128xf32>,
    %c0_25 = arith.constant 0 : index
    %c0_26 = arith.constant 0 : index
    %43 = vector.load %arg11[%c0_25, %c0_26] : memref<8x128xf32, #tpu.memory_space<vmem>>, vector<8x128xf32>
    tpu.vector_store %arg11[%c0_25, %c0_26], %36 {strides = array<i32>} : memref<8x128xf32, #tpu.memory_space<vmem>>, vector<8x128xf32>,
    return
  }
  func.func @transform_0(%arg0: i32) -> (i32, i32) {
    %c0_i32 = arith.constant 0 : i32
    %c0_i32_0 = arith.constant 0 : i32
    return %arg0, %c0_i32 : i32, i32
  }
  func.func @transform_1(%arg0: i32) -> (i32, i32) {
    %c0_i32 = arith.constant 0 : i32
    %c0_i32_0 = arith.constant 0 : i32
    return %arg0, %c0_i32 : i32, i32
  }
  func.func @transform_2(%arg0: i32) -> (i32, i32) {
    %c0_i32 = arith.constant 0 : i32
    %c0_i32_0 = arith.constant 0 : i32
    %c0_i32_1 = arith.constant 0 : i32
    return %c0_i32, %c0_i32_0 : i32, i32
  }
  func.func @transform_3(%arg0: i32) -> (i32, i32) {
    %c0_i32 = arith.constant 0 : i32
    %c0_i32_0 = arith.constant 0 : i32
    %c0_i32_1 = arith.constant 0 : i32
    return %c0_i32, %c0_i32_0 : i32, i32
  }
  func.func @transform_4(%arg0: i32) -> (i32, i32) {
    %c0_i32 = arith.constant 0 : i32
    %c0_i32_0 = arith.constant 0 : i32
    %c0_i32_1 = arith.constant 0 : i32
    return %c0_i32, %c0_i32_0 : i32, i32
  }
  func.func @transform_5(%arg0: i32) -> (i32, i32) {
    %c0_i32 = arith.constant 0 : i32
    %c0_i32_0 = arith.constant 0 : i32
    %c0_i32_1 = arith.constant 0 : i32
    return %c0_i32, %c0_i32_0 : i32, i32
  }
  func.func @transform_6(%arg0: i32) -> (i32, i32) {
    %c0_i32 = arith.constant 0 : i32
    %c0_i32_0 = arith.constant 0 : i32
    %c0_i32_1 = arith.constant 0 : i32
    return %c0_i32, %c0_i32_0 : i32, i32
  }
  func.func @transform_7(%arg0: i32) -> (i32, i32) {
    %c0_i32 = arith.constant 0 : i32
    %c0_i32_0 = arith.constant 0 : i32
    %c0_i32_1 = arith.constant 0 : i32
    return %c0_i32, %c0_i32_0 : i32, i32
  }
  func.func @transform_8(%arg0: i32) -> (i32, i32) {
    %c0_i32 = arith.constant 0 : i32
    %c0_i32_0 = arith.constant 0 : i32
    %c0_i32_1 = arith.constant 0 : i32
    return %c0_i32, %c0_i32_0 : i32, i32
  }
  func.func @transform_9(%arg0: i32) -> (i32, i32) {
    %c0_i32 = arith.constant 0 : i32
    %c0_i32_0 = arith.constant 0 : i32
    return %arg0, %c0_i32 : i32, i32
  }
  func.func @transform_10(%arg0: i32) -> (i32, i32) {
    %c0_i32 = arith.constant 0 : i32
    %c0_i32_0 = arith.constant 0 : i32
    return %arg0, %c0_i32 : i32, i32
  }
}

</mosaic_0001>

<llo_original>
// kernel: inspire_rnn_agent_forward.1
$region0: #{inspire_rnn_agent_forward.1}
  #allocation0 [shape = 'u32[]', space=smem, size = 0x4, offset = 0x4, fixed_abs, tag = 'smem constant byte address 0x4 - core index']
  #allocation1 [shape = 'u32[144,128]{1,0:T(1,128)}', space=vmem, size = 0x12000, scoped, tag = 'internal scratch']
  %s0 = inlined_call_operand.vmem [shape: f32[8,32], index: 0, kind: input, shape index: {}]
  %s1 = inlined_call_operand.vmem [shape: f32[8,128], index: 1, kind: input, shape index: {}, may-alias: {1,10}]
  %s2 = inlined_call_operand.vmem [shape: f32[32,128], index: 2, kind: input, shape index: {}]
  %s3 = inlined_call_operand.vmem [shape: f32[1,128], index: 3, kind: input, shape index: {}]
  %s4 = inlined_call_operand.hbm [shape: f32[128,512], index: 4, kind: input, shape index: {}]
  %s5 = inlined_call_operand.hbm [shape: f32[128,512], index: 5, kind: input, shape index: {}]
  %s6 = inlined_call_operand.vmem [shape: f32[1,512], index: 6, kind: input, shape index: {}]
  %s7 = inlined_call_operand.hbm [shape: f32[128,128], index: 7, kind: input, shape index: {}]
  %s8 = inlined_call_operand.vmem [shape: f32[1,128], index: 8, kind: input, shape index: {}]
  %s9 = inlined_call_operand.hbm [shape: f32[8,128], index: 9, kind: output, shape index: {0}]
  %s10 = inlined_call_operand.vmem [shape: f32[8,128], index: 10, kind: output, shape index: {1}, may-alias: {1,10}]
  %11 = xla_tuple %s9, %s10
  %s12 = sld [smem:[#allocation0]]
  $region66: #{inspire_rnn_agent_forward.1} parent=0
    _
  %s14 = ssub.s32 1, %s12
  %s15 = scalar_select 0, %s14, %s12
  $region1: #{inspire_rnn_agent_forward.1} parent=0
    #allocation2 [shape = 'u8[262144]{0}', space=vmem, size = 0x40000, scoped, tag = 'input window, operand 4, single buffered']
    #allocation3 [shape = 's32[1]{0}', space=sflag, size = 0x4, scoped, tag = 'scoped memory for inspire_rnn_agent_forward.1']
    #allocation4 [shape = 's32[1]{0}', space=sflag, size = 0x4, scoped, tag = 'scoped memory for inspire_rnn_agent_forward.1']
    #allocation5 [shape = 'u8[262144]{0}', space=vmem, size = 0x40000, scoped, tag = 'input window, operand 5, single buffered']
    #allocation6 [shape = 's32[1]{0}', space=sflag, size = 0x4, scoped, tag = 'scoped memory for inspire_rnn_agent_forward.1']
    #allocation7 [shape = 'u8[65536]{0}', space=vmem, size = 0x10000, scoped, tag = 'input window, operand 7, single buffered']
    #allocation8 [shape = 'u8[4096]{0}', space=vmem, size = 0x1000, scoped, tag = 'output window, operand 0, single buffered']
    %16 = vsyncpa [#allocation3], 0
    %17 = vsyncpa [#allocation6], 0
    %18 = vsyncpa [#allocation4], 0
    // Predicated region
    $region2: #{inspire_rnn_agent_forward.1} parent=1 // pred_check
      _
    $region3: #{inspire_rnn_agent_forward.1} parent=1 // pred_check_branch
      %20 = sbr.rel (0) target = $region5
    $region4: #{inspire_rnn_agent_forward.1} parent=1 // pred_region
      _
    $region5: #{inspire_rnn_agent_forward.1} parent=1 // pred_fallthru
      _
    // Predicated region
    $region6: #{inspire_rnn_agent_forward.1} parent=1 // pred_check
      _
    $region7: #{inspire_rnn_agent_forward.1} parent=1 // pred_check_branch
      %22 = sbr.rel (0) target = $region9
    $region8: #{inspire_rnn_agent_forward.1} parent=1 // pred_region
      _
    $region9: #{inspire_rnn_agent_forward.1} parent=1 // pred_fallthru
      _
    // Predicated region
    $region10: #{inspire_rnn_agent_forward.1} parent=1 // pred_check
      _
    $region11: #{inspire_rnn_agent_forward.1} parent=1 // pred_check_branch
      %24 = sbr.rel (0) target = $region13
    $region12: #{inspire_rnn_agent_forward.1} parent=1 // pred_region
      _
    $region13: #{inspire_rnn_agent_forward.1} parent=1 // pred_fallthru
      _
    // Predicated region
    $region14: #{inspire_rnn_agent_forward.1} parent=1 // pred_check
      _
    $region15: #{inspire_rnn_agent_forward.1} parent=1 // pred_check_branch
      %26 = sbr.rel (0) target = $region17
    $region16: #{inspire_rnn_agent_forward.1} parent=1 // pred_region
      _
    $region17: #{inspire_rnn_agent_forward.1} parent=1 // pred_fallthru
      _
    // Predicated region
    $region18: #{inspire_rnn_agent_forward.1} parent=1 // pred_check
      _
    $region19: #{inspire_rnn_agent_forward.1} parent=1 // pred_check_branch
      %28 = sbr.rel (0) target = $region21
    $region20: #{inspire_rnn_agent_forward.1} parent=1 // pred_region
      %s30 = ssub.s32 8192, 8192
      %31 = vsyncadd [#allocation3], %s30
      %s32 = sshll.u32 [#allocation2], 4
      %s33 = int_to_ptr.vmem [resolvable:$true] %s32
      %38 = dma.hbm_to_vmem [thread:$0]  %s4, 8192, %s33, [#allocation3], 512, 512, 32
    $region21: #{inspire_rnn_agent_forward.1} parent=1 // pred_fallthru
      _
    // Predicated region
    $region22: #{inspire_rnn_agent_forward.1} parent=1 // pred_check
      _
    $region23: #{inspire_rnn_agent_forward.1} parent=1 // pred_check_branch
      %40 = sbr.rel (0) target = $region25
    $region24: #{inspire_rnn_agent_forward.1} parent=1 // pred_region
      %s42 = ssub.s32 8192, 8192
      %43 = vsyncadd [#allocation6], %s42
      %s44 = sshll.u32 [#allocation5], 4
      %s45 = int_to_ptr.vmem [resolvable:$true] %s44
      %50 = dma.hbm_to_vmem [thread:$0]  %s5, 8192, %s45, [#allocation6], 512, 512, 32
    $region25: #{inspire_rnn_agent_forward.1} parent=1 // pred_fallthru
      _
    // Predicated region
    $region26: #{inspire_rnn_agent_forward.1} parent=1 // pred_check
      _
    $region27: #{inspire_rnn_agent_forward.1} parent=1 // pred_check_branch
      %52 = sbr.rel (0) target = $region29
    $region28: #{inspire_rnn_agent_forward.1} parent=1 // pred_region
      _
    $region29: #{inspire_rnn_agent_forward.1} parent=1 // pred_fallthru
      _
    // Predicated region
    $region30: #{inspire_rnn_agent_forward.1} parent=1 // pred_check
      _
    $region31: #{inspire_rnn_agent_forward.1} parent=1 // pred_check_branch
      %54 = sbr.rel (0) target = $region33
    $region32: #{inspire_rnn_agent_forward.1} parent=1 // pred_region
      %s56 = ssub.s32 2048, 2048
      %57 = vsyncadd [#allocation6], %s56
      %s58 = sshll.u32 [#allocation7], 4
      %s59 = int_to_ptr.vmem [resolvable:$true] %s58
      %64 = dma.hbm_to_vmem [thread:$0]  %s7, 2048, %s59, [#allocation6], 128, 128, 8
    $region33: #{inspire_rnn_agent_forward.1} parent=1 // pred_fallthru
      _
    // Predicated region
    $region34: #{inspire_rnn_agent_forward.1} parent=1 // pred_check
      _
    $region35: #{inspire_rnn_agent_forward.1} parent=1 // pred_check_branch
      %66 = sbr.rel (0) target = $region37
    $region36: #{inspire_rnn_agent_forward.1} parent=1 // pred_region
      _
    $region37: #{inspire_rnn_agent_forward.1} parent=1 // pred_fallthru
      _
    // Predicated region
    $region38: #{inspire_rnn_agent_forward.1} parent=1 // pred_check
      _
    $region39: #{inspire_rnn_agent_forward.1} parent=1 // pred_check_branch
      %68 = sbr.rel (0) target = $region41
    $region40: #{inspire_rnn_agent_forward.1} parent=1 // pred_region
      %69 = dma.done [#allocation3], 8192
    $region41: #{inspire_rnn_agent_forward.1} parent=1 // pred_fallthru
      _
    // Predicated region
    $region42: #{inspire_rnn_agent_forward.1} parent=1 // pred_check
      _
    $region43: #{inspire_rnn_agent_forward.1} parent=1 // pred_check_branch
      %71 = sbr.rel (0) target = $region45
    $region44: #{inspire_rnn_agent_forward.1} parent=1 // pred_region
      %72 = dma.done [#allocation6], 8192
    $region45: #{inspire_rnn_agent_forward.1} parent=1 // pred_fallthru
      _
    // Predicated region
    $region46: #{inspire_rnn_agent_forward.1} parent=1 // pred_check
      _
    $region47: #{inspire_rnn_agent_forward.1} parent=1 // pred_check_branch
      %74 = sbr.rel (0) target = $region49
    $region48: #{inspire_rnn_agent_forward.1} parent=1 // pred_region
      %75 = dma.done [#allocation6], 2048
    $region49: #{inspire_rnn_agent_forward.1} parent=1 // pred_fallthru
      _
    %v76 = vld [vmem:[%s0] sm:$0xff]
    %v77 = vld [vmem:[%s1] sm:$0xff]
    %v78 = vld [vmem:[%s2] sm:$0xff]
    %v79 = vld [vmem:[%s2 + $0x8] sm:$0xff]
    %v80 = vld [vmem:[%s2 + $0x10] sm:$0xff]
    %v81 = vld [vmem:[%s2 + $0x18] sm:$0xff]
    %v82 = vld [vmem:[%s3] sm:$0x1]
    %v84 = vlaneseq
    %v85 = vshrl.u32 %v84, 7
    %v86 = vsub.s32 0, %v85
    %v87 = vrot.slane %v82, %v86
    %vm89 = vcmask 261120
    %v91 = vsel %vm89, %v76, 0
    %93 = vmatprep.subr.mxu0 0.0
    %94 = vmatpush1.msra.mxu0 %v78
    %95 = vmatprep.subr.mxu0 0.0
    %96 = vmatpush1.msra.mxu0 %v79
    %97 = vmatprep.subr.mxu0 0.0
    %98 = vmatpush1.msra.mxu0 %v80
    %99 = vmatprep.subr.mxu0 0.0
    %100 = vmatpush1.msra.mxu0 %v81
    %101 = vmatprep.subr.mxu0 0.0
    %102 = vmatpush1.msra.mxu0 0.0
    %103 = vmatprep.subr.mxu0 0.0
    %104 = vmatpush1.msra.mxu0 0.0
    %105 = vmatprep.subr.mxu0 0.0
    %106 = vmatpush1.msra.mxu0 0.0
    %107 = vmatprep.subr.mxu0 0.0
    %108 = vmatpush1.msra.mxu0 0.0
    %109 = vmatprep.subr.mxu0 0.0
    %110 = vmatpush1.msra.mxu0 0.0
    %111 = vmatprep.subr.mxu0 0.0
    %112 = vmatpush1.msra.mxu0 0.0
    %113 = vmatprep.subr.mxu0 0.0
    %114 = vmatpush1.msra.mxu0 0.0
    %115 = vmatprep.subr.mxu0 0.0
    %116 = vmatpush1.msra.mxu0 0.0
    %117 = vmatprep.subr.mxu0 0.0
    %118 = vmatpush1.msra.mxu0 0.0
    %119 = vmatprep.subr.mxu0 0.0
    %120 = vmatpush1.msra.mxu0 0.0
    %121 = vmatprep.subr.mxu0 0.0
    %122 = vmatpush1.msra.mxu0 0.0
    %123 = vmatprep.subr.mxu0 0.0
    %124 = vmatpush1.msra.mxu0 0.0
    %125 = vmatprep.subr.mxu0 0.0
    %126 = vmatpush1.msra.mxu0 0.0
    %127 = vmatprep.subr.mxu0 0.0
    %128 = vmatpush1.msra.mxu0 0.0
    %129 = vmatprep.subr.mxu0 0.0
    %130 = vmatpush1.msra.mxu0 0.0
    %131 = vmatprep.subr.mxu0 0.0
    %132 = vmatpush1.msra.mxu0 0.0
    %133 = vmatprep.subr.mxu0 0.0
    %134 = vmatpush1.msra.mxu0 0.0
    %135 = vmatprep.subr.mxu0 0.0
    %136 = vmatpush1.msra.mxu0 0.0
    %137 = vmatprep.subr.mxu0 0.0
    %138 = vmatpush1.msra.mxu0 0.0
    %139 = vmatprep.subr.mxu0 0.0
    %140 = vmatpush1.msra.mxu0 0.0
    %141 = vmatprep.subr.mxu0 0.0
    %142 = vmatpush1.msra.mxu0 0.0
    %143 = vmatprep.subr.mxu0 0.0
    %144 = vmatpush1.msra.mxu0 0.0
    %145 = vmatprep.subr.mxu0 0.0
    %146 = vmatpush1.msra.mxu0 0.0
    %147 = vmatprep.subr.mxu0 0.0
    %148 = vmatpush1.msra.mxu0 0.0
    %149 = vmatprep.subr.mxu0 0.0
    %150 = vmatpush1.msra.mxu0 0.0
    %151 = vmatprep.subr.mxu0 0.0
    %152 = vmatpush1.msra.mxu0 0.0
    %153 = vmatprep.subr.mxu0 0.0
    %154 = vmatpush1.msra.mxu0 0.0
    %155 = vmatprep.subr.mxu0 0.0
    %156 = vmatpush1.msra.mxu0 0.0
    %157 = vmatprep.mubr.f32.mxu0 0.0
    %158 = vmatmul.mubr.f32.gmra.mrb[0].mxu0 %v91
    %v159 = vpop.f32.mrb[0].mxu0
    %v160 = vadd.f32 %v87, %v159
    %v161 = vpop.f32.mrb[0].mxu0
    %162 = vdwg.mxu0
    %v163 = vmax.f32 %v160, 0.0
    %v164 = vld [vmem:[#allocation2] sm:$0xff]
    %v165 = vld [vmem:[#allocation2 + $0x8] sm:$0xff]
    %v166 = vld [vmem:[#allocation2 + $0x10] sm:$0xff]
    %v167 = vld [vmem:[#allocation2 + $0x18] sm:$0xff]
    %v168 = vld [vmem:[#allocation2 + $0x20] sm:$0xff]
    %v169 = vld [vmem:[#allocation2 + $0x28] sm:$0xff]
    %v170 = vld [vmem:[#allocation2 + $0x30] sm:$0xff]
    %v171 = vld [vmem:[#allocation2 + $0x38] sm:$0xff]
    %v172 = vld [vmem:[#allocation2 + $0x40] sm:$0xff]
    %v173 = vld [vmem:[#allocation2 + $0x48] sm:$0xff]
    %v174 = vld [vmem:[#allocation2 + $0x50] sm:$0xff]
    %v175 = vld [vmem:[#allocation2 + $0x58] sm:$0xff]
    %v176 = vld [vmem:[#allocation2 + $0x60] sm:$0xff]
    %v177 = vld [vmem:[#allocation2 + $0x68] sm:$0xff]
    %v178 = vld [vmem:[#allocation2 + $0x70] sm:$0xff]
    %v179 = vld [vmem:[#allocation2 + $0x78] sm:$0xff]
    %v180 = vld [vmem:[#allocation2 + $0x80] sm:$0xff]
    %v181 = vld [vmem:[#allocation2 + $0x88] sm:$0xff]
    %v182 = vld [vmem:[#allocation2 + $0x90] sm:$0xff]
    %v183 = vld [vmem:[#allocation2 + $0x98] sm:$0xff]
    %v184 = vld [vmem:[#allocation2 + $0xa0] sm:$0xff]
    %v185 = vld [vmem:[#allocation2 + $0xa8] sm:$0xff]
    %v186 = vld [vmem:[#allocation2 + $0xb0] sm:$0xff]
    %v187 = vld [vmem:[#allocation2 + $0xb8] sm:$0xff]
    %v188 = vld [vmem:[#allocation2 + $0xc0] sm:$0xff]
    %v189 = vld [vmem:[#allocation2 + $0xc8] sm:$0xff]
    %v190 = vld [vmem:[#allocation2 + $0xd0] sm:$0xff]
    %v191 = vld [vmem:[#allocation2 + $0xd8] sm:$0xff]
    %v192 = vld [vmem:[#allocation2 + $0xe0] sm:$0xff]
    %v193 = vld [vmem:[#allocation2 + $0xe8] sm:$0xff]
    %v194 = vld [vmem:[#allocation2 + $0xf0] sm:$0xff]
    %v195 = vld [vmem:[#allocation2 + $0xf8] sm:$0xff]
    %v196 = vld [vmem:[#allocation2 + $0x100] sm:$0xff]
    %v197 = vld [vmem:[#allocation2 + $0x108] sm:$0xff]
    %v198 = vld [vmem:[#allocation2 + $0x110] sm:$0xff]
    %v199 = vld [vmem:[#allocation2 + $0x118] sm:$0xff]
    %v200 = vld [vmem:[#allocation2 + $0x120] sm:$0xff]
    %v201 = vld [vmem:[#allocation2 + $0x128] sm:$0xff]
    %v202 = vld [vmem:[#allocation2 + $0x130] sm:$0xff]
    %v203 = vld [vmem:[#allocation2 + $0x138] sm:$0xff]
    %v204 = vld [vmem:[#allocation2 + $0x140] sm:$0xff]
    %v205 = vld [vmem:[#allocation2 + $0x148] sm:$0xff]
    %v206 = vld [vmem:[#allocation2 + $0x150] sm:$0xff]
    %v207 = vld [vmem:[#allocation2 + $0x158] sm:$0xff]
    %v208 = vld [vmem:[#allocation2 + $0x160] sm:$0xff]
    %v209 = vld [vmem:[#allocation2 + $0x168] sm:$0xff]
    %v210 = vld [vmem:[#allocation2 + $0x170] sm:$0xff]
    %v211 = vld [vmem:[#allocation2 + $0x178] sm:$0xff]
    %v212 = vld [vmem:[#allocation2 + $0x180] sm:$0xff]
    %v213 = vld [vmem:[#allocation2 + $0x188] sm:$0xff]
    %v214 = vld [vmem:[#allocation2 + $0x190] sm:$0xff]
    %v215 = vld [vmem:[#allocation2 + $0x198] sm:$0xff]
    %v216 = vld [vmem:[#allocation2 + $0x1a0] sm:$0xff]
    %v217 = vld [vmem:[#allocation2 + $0x1a8] sm:$0xff]
    %v218 = vld [vmem:[#allocation2 + $0x1b0] sm:$0xff]
    %v219 = vld [vmem:[#allocation2 + $0x1b8] sm:$0xff]
    %v220 = vld [vmem:[#allocation2 + $0x1c0] sm:$0xff]
    %v221 = vld [vmem:[#allocation2 + $0x1c8] sm:$0xff]
    %v222 = vld [vmem:[#allocation2 + $0x1d0] sm:$0xff]
    %v223 = vld [vmem:[#allocation2 + $0x1d8] sm:$0xff]
    %v224 = vld [vmem:[#allocation2 + $0x1e0] sm:$0xff]
    %v225 = vld [vmem:[#allocation2 + $0x1e8] sm:$0xff]
    %v226 = vld [vmem:[#allocation2 + $0x1f0] sm:$0xff]
    %v227 = vld [vmem:[#allocation2 + $0x1f8] sm:$0xff]
    %v228 = vld [vmem:[#allocation5] sm:$0xff]
    %v229 = vld [vmem:[#allocation5 + $0x8] sm:$0xff]
    %v230 = vld [vmem:[#allocation5 + $0x10] sm:$0xff]
    %v231 = vld [vmem:[#allocation5 + $0x18] sm:$0xff]
    %v232 = vld [vmem:[#allocation5 + $0x20] sm:$0xff]
    %v233 = vld [vmem:[#allocation5 + $0x28] sm:$0xff]
    %v234 = vld [vmem:[#allocation5 + $0x30] sm:$0xff]
    %v235 = vld [vmem:[#allocation5 + $0x38] sm:$0xff]
    %v236 = vld [vmem:[#allocation5 + $0x40] sm:$0xff]
    %v237 = vld [vmem:[#allocation5 + $0x48] sm:$0xff]
    %v238 = vld [vmem:[#allocation5 + $0x50] sm:$0xff]
    %v239 = vld [vmem:[#allocation5 + $0x58] sm:$0xff]
    %v240 = vld [vmem:[#allocation5 + $0x60] sm:$0xff]
    %v241 = vld [vmem:[#allocation5 + $0x68] sm:$0xff]
    %v242 = vld [vmem:[#allocation5 + $0x70] sm:$0xff]
    %v243 = vld [vmem:[#allocation5 + $0x78] sm:$0xff]
    %v244 = vld [vmem:[#allocation5 + $0x80] sm:$0xff]
    %v245 = vld [vmem:[#allocation5 + $0x88] sm:$0xff]
    %v246 = vld [vmem:[#allocation5 + $0x90] sm:$0xff]
    %v247 = vld [vmem:[#allocation5 + $0x98] sm:$0xff]
    %v248 = vld [vmem:[#allocation5 + $0xa0] sm:$0xff]
    %v249 = vld [vmem:[#allocation5 + $0xa8] sm:$0xff]
    %v250 = vld [vmem:[#allocation5 + $0xb0] sm:$0xff]
    %v251 = vld [vmem:[#allocation5 + $0xb8] sm:$0xff]
    %v252 = vld [vmem:[#allocation5 + $0xc0] sm:$0xff]
    %v253 = vld [vmem:[#allocation5 + $0xc8] sm:$0xff]
    %v254 = vld [vmem:[#allocation5 + $0xd0] sm:$0xff]
    %v255 = vld [vmem:[#allocation5 + $0xd8] sm:$0xff]
    %v256 = vld [vmem:[#allocation5 + $0xe0] sm:$0xff]
    %v257 = vld [vmem:[#allocation5 + $0xe8] sm:$0xff]
    %v258 = vld [vmem:[#allocation5 + $0xf0] sm:$0xff]
    %v259 = vld [vmem:[#allocation5 + $0xf8] sm:$0xff]
    %v260 = vld [vmem:[#allocation5 + $0x100] sm:$0xff]
    %v261 = vld [vmem:[#allocation5 + $0x108] sm:$0xff]
    %v262 = vld [vmem:[#allocation5 + $0x110] sm:$0xff]
    %v263 = vld [vmem:[#allocation5 + $0x118] sm:$0xff]
    %v264 = vld [vmem:[#allocation5 + $0x120] sm:$0xff]
    %v265 = vld [vmem:[#allocation5 + $0x128] sm:$0xff]
    %v266 = vld [vmem:[#allocation5 + $0x130] sm:$0xff]
    %v267 = vld [vmem:[#allocation5 + $0x138] sm:$0xff]
    %v268 = vld [vmem:[#allocation5 + $0x140] sm:$0xff]
    %v269 = vld [vmem:[#allocation5 + $0x148] sm:$0xff]
    %v270 = vld [vmem:[#allocation5 + $0x150] sm:$0xff]
    %v271 = vld [vmem:[#allocation5 + $0x158] sm:$0xff]
    %v272 = vld [vmem:[#allocation5 + $0x160] sm:$0xff]
    %v273 = vld [vmem:[#allocation5 + $0x168] sm:$0xff]
    %v274 = vld [vmem:[#allocation5 + $0x170] sm:$0xff]
    %v275 = vld [vmem:[#allocation5 + $0x178] sm:$0xff]
    %v276 = vld [vmem:[#allocation5 + $0x180] sm:$0xff]
    %v277 = vld [vmem:[#allocation5 + $0x188] sm:$0xff]
    %v278 = vld [vmem:[#allocation5 + $0x190] sm:$0xff]
    %v279 = vld [vmem:[#allocation5 + $0x198] sm:$0xff]
    %v280 = vld [vmem:[#allocation5 + $0x1a0] sm:$0xff]
    %v281 = vld [vmem:[#allocation5 + $0x1a8] sm:$0xff]
    %v282 = vld [vmem:[#allocation5 + $0x1b0] sm:$0xff]
    %v283 = vld [vmem:[#allocation5 + $0x1b8] sm:$0xff]
    %v284 = vld [vmem:[#allocation5 + $0x1c0] sm:$0xff]
    %v285 = vld [vmem:[#allocation5 + $0x1c8] sm:$0xff]
    %v286 = vld [vmem:[#allocation5 + $0x1d0] sm:$0xff]
    %v287 = vld [vmem:[#allocation5 + $0x1d8] sm:$0xff]
    %v288 = vld [vmem:[#allocation5 + $0x1e0] sm:$0xff]
    %v289 = vld [vmem:[#allocation5 + $0x1e8] sm:$0xff]
    %v290 = vld [vmem:[#allocation5 + $0x1f0] sm:$0xff]
    %v291 = vld [vmem:[#allocation5 + $0x1f8] sm:$0xff]
    %292 = vmatprep.subr.mxu0 %v229
    %293 = vmatpush1.msra.mxu0 %v228
    %294 = vmatprep.subr.mxu0 %v233
    %295 = vmatpush1.msra.mxu0 %v232
    %296 = vmatprep.subr.mxu0 %v237
    %297 = vmatpush1.msra.mxu0 %v236
    %298 = vmatprep.subr.mxu0 %v241
    %299 = vmatpush1.msra.mxu0 %v240
    %300 = vmatprep.subr.mxu0 %v245
    %301 = vmatpush1.msra.mxu0 %v244
    %302 = vmatprep.subr.mxu0 %v249
    %303 = vmatpush1.msra.mxu0 %v248
    %304 = vmatprep.subr.mxu0 %v253
    %305 = vmatpush1.msra.mxu0 %v252
    %306 = vmatprep.subr.mxu0 %v257
    %307 = vmatpush1.msra.mxu0 %v256
    %308 = vmatprep.subr.mxu0 %v261
    %309 = vmatpush1.msra.mxu0 %v260
    %310 = vmatprep.subr.mxu0 %v265
    %311 = vmatpush1.msra.mxu0 %v264
    %312 = vmatprep.subr.mxu0 %v269
    %313 = vmatpush1.msra.mxu0 %v268
    %314 = vmatprep.subr.mxu0 %v273
    %315 = vmatpush1.msra.mxu0 %v272
    %316 = vmatprep.subr.mxu0 %v277
    %317 = vmatpush1.msra.mxu0 %v276
    %318 = vmatprep.subr.mxu0 %v281
    %319 = vmatpush1.msra.mxu0 %v280
    %320 = vmatprep.subr.mxu0 %v285
    %321 = vmatpush1.msra.mxu0 %v284
    %322 = vmatprep.subr.mxu0 %v289
    %323 = vmatpush1.msra.mxu0 %v288
    %324 = vmatprep.subr.mxu0 0.0
    %325 = vmatpush1.msra.mxu0 0.0
    %326 = vmatprep.subr.mxu0 0.0
    %327 = vmatpush1.msra.mxu0 0.0
    %328 = vmatprep.subr.mxu0 0.0
    %329 = vmatpush1.msra.mxu0 0.0
    %330 = vmatprep.subr.mxu0 0.0
    %331 = vmatpush1.msra.mxu0 0.0
    %332 = vmatprep.subr.mxu0 0.0
    %333 = vmatpush1.msra.mxu0 0.0
    %334 = vmatprep.subr.mxu0 0.0
    %335 = vmatpush1.msra.mxu0 0.0
    %336 = vmatprep.subr.mxu0 0.0
    %337 = vmatpush1.msra.mxu0 0.0
    %338 = vmatprep.subr.mxu0 0.0
    %339 = vmatpush1.msra.mxu0 0.0
    %340 = vmatprep.subr.mxu0 0.0
    %341 = vmatpush1.msra.mxu0 0.0
    %342 = vmatprep.subr.mxu0 0.0
    %343 = vmatpush1.msra.mxu0 0.0
    %344 = vmatprep.subr.mxu0 0.0
    %345 = vmatpush1.msra.mxu0 0.0
    %346 = vmatprep.subr.mxu0 0.0
    %347 = vmatpush1.msra.mxu0 0.0
    %348 = vmatprep.subr.mxu0 0.0
    %349 = vmatpush1.msra.mxu0 0.0
    %350 = vmatprep.subr.mxu0 0.0
    %351 = vmatpush1.msra.mxu0 0.0
    %352 = vmatprep.subr.mxu0 0.0
    %353 = vmatpush1.msra.mxu0 0.0
    %354 = vmatprep.subr.mxu0 0.0
    %355 = vmatpush1.msra.mxu0 0.0
    %356 = vmatprep.mubr.f32.mxu0 0.0
    %357 = vmatmul.mubr.f32.gmra.mrb[0].mxu0 %v77
    %v358 = vpop.f32.mrb[0].mxu0
    %v359 = vadd.f32 0.0, %v358
    %v360 = vpop.f32.mrb[0].mxu0
    %v361 = vadd.f32 0.0, %v360
    %362 = vdwg.mxu0
    %363 = vmatprep.subr.mxu0 %v231
    %364 = vmatpush1.msra.mxu0 %v230
    %365 = vmatprep.subr.mxu0 %v235
    %366 = vmatpush1.msra.mxu0 %v234
    %367 = vmatprep.subr.mxu0 %v239
    %368 = vmatpush1.msra.mxu0 %v238
    %369 = vmatprep.subr.mxu0 %v243
    %370 = vmatpush1.msra.mxu0 %v242
    %371 = vmatprep.subr.mxu0 %v247
    %372 = vmatpush1.msra.mxu0 %v246
    %373 = vmatprep.subr.mxu0 %v251
    %374 = vmatpush1.msra.mxu0 %v250
    %375 = vmatprep.subr.mxu0 %v255
    %376 = vmatpush1.msra.mxu0 %v254
    %377 = vmatprep.subr.mxu0 %v259
    %378 = vmatpush1.msra.mxu0 %v258
    %379 = vmatprep.subr.mxu0 %v263
    %380 = vmatpush1.msra.mxu0 %v262
    %381 = vmatprep.subr.mxu0 %v267
    %382 = vmatpush1.msra.mxu0 %v266
    %383 = vmatprep.subr.mxu0 %v271
    %384 = vmatpush1.msra.mxu0 %v270
    %385 = vmatprep.subr.mxu0 %v275
    %386 = vmatpush1.msra.mxu0 %v274
    %387 = vmatprep.subr.mxu0 %v279
    %388 = vmatpush1.msra.mxu0 %v278
    %389 = vmatprep.subr.mxu0 %v283
    %390 = vmatpush1.msra.mxu0 %v282
    %391 = vmatprep.subr.mxu0 %v287
    %392 = vmatpush1.msra.mxu0 %v286
    %393 = vmatprep.subr.mxu0 %v291
    %394 = vmatpush1.msra.mxu0 %v290
    %395 = vmatprep.subr.mxu0 0.0
    %396 = vmatpush1.msra.mxu0 0.0
    %397 = vmatprep.subr.mxu0 0.0
    %398 = vmatpush1.msra.mxu0 0.0
    %399 = vmatprep.subr.mxu0 0.0
    %400 = vmatpush1.msra.mxu0 0.0
    %401 = vmatprep.subr.mxu0 0.0
    %402 = vmatpush1.msra.mxu0 0.0
    %403 = vmatprep.subr.mxu0 0.0
    %404 = vmatpush1.msra.mxu0 0.0
    %405 = vmatprep.subr.mxu0 0.0
    %406 = vmatpush1.msra.mxu0 0.0
    %407 = vmatprep.subr.mxu0 0.0
    %408 = vmatpush1.msra.mxu0 0.0
    %409 = vmatprep.subr.mxu0 0.0
    %410 = vmatpush1.msra.mxu0 0.0
    %411 = vmatprep.subr.mxu0 0.0
    %412 = vmatpush1.msra.mxu0 0.0
    %413 = vmatprep.subr.mxu0 0.0
    %414 = vmatpush1.msra.mxu0 0.0
    %415 = vmatprep.subr.mxu0 0.0
    %416 = vmatpush1.msra.mxu0 0.0
    %417 = vmatprep.subr.mxu0 0.0
    %418 = vmatpush1.msra.mxu0 0.0
    %419 = vmatprep.subr.mxu0 0.0
    %420 = vmatpush1.msra.mxu0 0.0
    %421 = vmatprep.subr.mxu0 0.0
    %422 = vmatpush1.msra.mxu0 0.0
    %423 = vmatprep.subr.mxu0 0.0
    %424 = vmatpush1.msra.mxu0 0.0
    %425 = vmatprep.subr.mxu0 0.0
    %426 = vmatpush1.msra.mxu0 0.0
    %427 = vmatprep.mubr.f32.mxu0 0.0
    %428 = vmatmul.mubr.f32.gmra.mrb[0].mxu0 %v77
    %v429 = vpop.f32.mrb[0].mxu0
    %v430 = vadd.f32 0.0, %v429
    %v431 = vpop.f32.mrb[0].mxu0
    %v432 = vadd.f32 0.0, %v431
    %433 = vdwg.mxu0
    %434 = vmatprep.subr.mxu0 %v165
    %435 = vmatpush1.msra.mxu0 %v164
    %436 = vmatprep.subr.mxu0 %v169
    %437 = vmatpush1.msra.mxu0 %v168
    %438 = vmatprep.subr.mxu0 %v173
    %439 = vmatpush1.msra.mxu0 %v172
    %440 = vmatprep.subr.mxu0 %v177
    %441 = vmatpush1.msra.mxu0 %v176
    %442 = vmatprep.subr.mxu0 %v181
    %443 = vmatpush1.msra.mxu0 %v180
    %444 = vmatprep.subr.mxu0 %v185
    %445 = vmatpush1.msra.mxu0 %v184
    %446 = vmatprep.subr.mxu0 %v189
    %447 = vmatpush1.msra.mxu0 %v188
    %448 = vmatprep.subr.mxu0 %v193
    %449 = vmatpush1.msra.mxu0 %v192
    %450 = vmatprep.subr.mxu0 %v197
    %451 = vmatpush1.msra.mxu0 %v196
    %452 = vmatprep.subr.mxu0 %v201
    %453 = vmatpush1.msra.mxu0 %v200
    %454 = vmatprep.subr.mxu0 %v205
    %455 = vmatpush1.msra.mxu0 %v204
    %456 = vmatprep.subr.mxu0 %v209
    %457 = vmatpush1.msra.mxu0 %v208
    %458 = vmatprep.subr.mxu0 %v213
    %459 = vmatpush1.msra.mxu0 %v212
    %460 = vmatprep.subr.mxu0 %v217
    %461 = vmatpush1.msra.mxu0 %v216
    %462 = vmatprep.subr.mxu0 %v221
    %463 = vmatpush1.msra.mxu0 %v220
    %464 = vmatprep.subr.mxu0 %v225
    %465 = vmatpush1.msra.mxu0 %v224
    %466 = vmatprep.subr.mxu0 0.0
    %467 = vmatpush1.msra.mxu0 0.0
    %468 = vmatprep.subr.mxu0 0.0
    %469 = vmatpush1.msra.mxu0 0.0
    %470 = vmatprep.subr.mxu0 0.0
    %471 = vmatpush1.msra.mxu0 0.0
    %472 = vmatprep.subr.mxu0 0.0
    %473 = vmatpush1.msra.mxu0 0.0
    %474 = vmatprep.subr.mxu0 0.0
    %475 = vmatpush1.msra.mxu0 0.0
    %476 = vmatprep.subr.mxu0 0.0
    %477 = vmatpush1.msra.mxu0 0.0
    %478 = vmatprep.subr.mxu0 0.0
    %479 = vmatpush1.msra.mxu0 0.0
    %480 = vmatprep.subr.mxu0 0.0
    %481 = vmatpush1.msra.mxu0 0.0
    %482 = vmatprep.subr.mxu0 0.0
    %483 = vmatpush1.msra.mxu0 0.0
    %484 = vmatprep.subr.mxu0 0.0
    %485 = vmatpush1.msra.mxu0 0.0
    %486 = vmatprep.subr.mxu0 0.0
    %487 = vmatpush1.msra.mxu0 0.0
    %488 = vmatprep.subr.mxu0 0.0
    %489 = vmatpush1.msra.mxu0 0.0
    %490 = vmatprep.subr.mxu0 0.0
    %491 = vmatpush1.msra.mxu0 0.0
    %492 = vmatprep.subr.mxu0 0.0
    %493 = vmatpush1.msra.mxu0 0.0
    %494 = vmatprep.subr.mxu0 0.0
    %495 = vmatpush1.msra.mxu0 0.0
    %496 = vmatprep.subr.mxu0 0.0
    %497 = vmatpush1.msra.mxu0 0.0
    %498 = vmatprep.mubr.f32.mxu0 0.0
    %499 = vmatmul.mubr.f32.gmra.mrb[0].mxu0 %v163
    %v500 = vpop.f32.mrb[0].mxu0
    %v501 = vadd.f32 %v359, %v500
    %v502 = vpop.f32.mrb[0].mxu0
    %v503 = vadd.f32 %v361, %v502
    %504 = vdwg.mxu0
    %505 = vmatprep.subr.mxu0 %v167
    %506 = vmatpush1.msra.mxu0 %v166
    %507 = vmatprep.subr.mxu0 %v171
    %508 = vmatpush1.msra.mxu0 %v170
    %509 = vmatprep.subr.mxu0 %v175
    %510 = vmatpush1.msra.mxu0 %v174
    %511 = vmatprep.subr.mxu0 %v179
    %512 = vmatpush1.msra.mxu0 %v178
    %513 = vmatprep.subr.mxu0 %v183
    %514 = vmatpush1.msra.mxu0 %v182
    %515 = vmatprep.subr.mxu0 %v187
    %516 = vmatpush1.msra.mxu0 %v186
    %517 = vmatprep.subr.mxu0 %v191
    %518 = vmatpush1.msra.mxu0 %v190
    %519 = vmatprep.subr.mxu0 %v195
    %520 = vmatpush1.msra.mxu0 %v194
    %521 = vmatprep.subr.mxu0 %v199
    %522 = vmatpush1.msra.mxu0 %v198
    %523 = vmatprep.subr.mxu0 %v203
    %524 = vmatpush1.msra.mxu0 %v202
    %525 = vmatprep.subr.mxu0 %v207
    %526 = vmatpush1.msra.mxu0 %v206
    %527 = vmatprep.subr.mxu0 %v211
    %528 = vmatpush1.msra.mxu0 %v210
    %529 = vmatprep.subr.mxu0 %v215
    %530 = vmatpush1.msra.mxu0 %v214
    %531 = vmatprep.subr.mxu0 %v219
    %532 = vmatpush1.msra.mxu0 %v218
    %533 = vmatprep.subr.mxu0 %v223
    %534 = vmatpush1.msra.mxu0 %v222
    %535 = vmatprep.subr.mxu0 %v227
    %536 = vmatpush1.msra.mxu0 %v226
    %537 = vmatprep.subr.mxu0 0.0
    %538 = vmatpush1.msra.mxu0 0.0
    %539 = vmatprep.subr.mxu0 0.0
    %540 = vmatpush1.msra.mxu0 0.0
    %541 = vmatprep.subr.mxu0 0.0
    %542 = vmatpush1.msra.mxu0 0.0
    %543 = vmatprep.subr.mxu0 0.0
    %544 = vmatpush1.msra.mxu0 0.0
    %545 = vmatprep.subr.mxu0 0.0
    %546 = vmatpush1.msra.mxu0 0.0
    %547 = vmatprep.subr.mxu0 0.0
    %548 = vmatpush1.msra.mxu0 0.0
    %549 = vmatprep.subr.mxu0 0.0
    %550 = vmatpush1.msra.mxu0 0.0
    %551 = vmatprep.subr.mxu0 0.0
    %552 = vmatpush1.msra.mxu0 0.0
    %553 = vmatprep.subr.mxu0 0.0
    %554 = vmatpush1.msra.mxu0 0.0
    %555 = vmatprep.subr.mxu0 0.0
    %556 = vmatpush1.msra.mxu0 0.0
    %557 = vmatprep.subr.mxu0 0.0
    %558 = vmatpush1.msra.mxu0 0.0
    %559 = vmatprep.subr.mxu0 0.0
    %560 = vmatpush1.msra.mxu0 0.0
    %561 = vmatprep.subr.mxu0 0.0
    %562 = vmatpush1.msra.mxu0 0.0
    %563 = vmatprep.subr.mxu0 0.0
    %564 = vmatpush1.msra.mxu0 0.0
    %565 = vmatprep.subr.mxu0 0.0
    %566 = vmatpush1.msra.mxu0 0.0
    %567 = vmatprep.subr.mxu0 0.0
    %568 = vmatpush1.msra.mxu0 0.0
    %569 = vmatprep.mubr.f32.mxu0 0.0
    %570 = vmatmul.mubr.f32.gmra.mrb[0].mxu0 %v163
    %v571 = vpop.f32.mrb[0].mxu0
    %v572 = vadd.f32 %v430, %v571
    %v573 = vpop.f32.mrb[0].mxu0
    %v574 = vadd.f32 %v432, %v573
    %575 = vdwg.mxu0
    %v576 = vld [vmem:[%s6] sm:$0xf]
    %v578 = vlaneseq
    %v579 = vshrl.u32 %v578, 7
    %v580 = vsub.s32 0, %v579
    %v581 = vrot.slane %v576, %v580
    %v582 = vlaneseq
    %v583 = vshrl.u32 %v582, 7
    %v584 = vsub.s32 1, %v583
    %v585 = vrot.slane %v576, %v584
    %v586 = vlaneseq
    %v587 = vshrl.u32 %v586, 7
    %v588 = vsub.s32 2, %v587
    %v589 = vrot.slane %v576, %v588
    %v590 = vlaneseq
    %v591 = vshrl.u32 %v590, 7
    %v592 = vsub.s32 3, %v591
    %v593 = vrot.slane %v576, %v592
    %v598 = vadd.f32 %v501, %v581
    %v599 = vadd.f32 %v503, %v585
    %v600 = vadd.f32 %v572, %v589
    %v601 = vadd.f32 %v574, %v593
    %v602 = vxor.u32 %v598, 2147483648
    %v603 = vmul.f32 %v602, 1.442695
    %v604 = vpow.pop %v603
    %v605 = vadd.f32 %v604, 1.0
    %v606 = vrcp.pop %v605
    %v607 = vmul.f32 1.0, %v606
    %v608 = vxor.u32 %v599, 2147483648
    %v609 = vmul.f32 %v608, 1.442695
    %v610 = vpow.pop %v609
    %v611 = vadd.f32 %v610, 1.0
    %v612 = vrcp.pop %v611
    %v613 = vmul.f32 1.0, %v612
    %v614 = vmul.f32 %v607, %v601
    %v615 = vadd.f32 %v600, %v614
    %v616 = vtanh.pop %v615
    %v617 = vsub.f32 %v77, %v616
    %v618 = vmul.f32 %v613, %v617
    %v619 = vadd.f32 %v616, %v618
    %v620 = vld [vmem:[#allocation7] sm:$0xff]
    %v621 = vld [vmem:[#allocation7 + $0x8] sm:$0xff]
    %v622 = vld [vmem:[#allocation7 + $0x10] sm:$0xff]
    %v623 = vld [vmem:[#allocation7 + $0x18] sm:$0xff]
    %v624 = vld [vmem:[#allocation7 + $0x20] sm:$0xff]
    %v625 = vld [vmem:[#allocation7 + $0x28] sm:$0xff]
    %v626 = vld [vmem:[#allocation7 + $0x30] sm:$0xff]
    %v627 = vld [vmem:[#allocation7 + $0x38] sm:$0xff]
    %v628 = vld [vmem:[#allocation7 + $0x40] sm:$0xff]
    %v629 = vld [vmem:[#allocation7 + $0x48] sm:$0xff]
    %v630 = vld [vmem:[#allocation7 + $0x50] sm:$0xff]
    %v631 = vld [vmem:[#allocation7 + $0x58] sm:$0xff]
    %v632 = vld [vmem:[#allocation7 + $0x60] sm:$0xff]
    %v633 = vld [vmem:[#allocation7 + $0x68] sm:$0xff]
    %v634 = vld [vmem:[#allocation7 + $0x70] sm:$0xff]
    %v635 = vld [vmem:[#allocation7 + $0x78] sm:$0xff]
    %v636 = vld [vmem:[%s8] sm:$0x1]
    %v638 = vlaneseq
    %v639 = vshrl.u32 %v638, 7
    %v640 = vsub.s32 0, %v639
    %v641 = vrot.slane %v636, %v640
    %643 = vmatprep.subr.mxu0 0.0
    %644 = vmatpush1.msra.mxu0 %v620
    %645 = vmatprep.subr.mxu0 0.0
    %646 = vmatpush1.msra.mxu0 %v621
    %647 = vmatprep.subr.mxu0 0.0
    %648 = vmatpush1.msra.mxu0 %v622
    %649 = vmatprep.subr.mxu0 0.0
    %650 = vmatpush1.msra.mxu0 %v623
    %651 = vmatprep.subr.mxu0 0.0
    %652 = vmatpush1.msra.mxu0 %v624
    %653 = vmatprep.subr.mxu0 0.0
    %654 = vmatpush1.msra.mxu0 %v625
    %655 = vmatprep.subr.mxu0 0.0
    %656 = vmatpush1.msra.mxu0 %v626
    %657 = vmatprep.subr.mxu0 0.0
    %658 = vmatpush1.msra.mxu0 %v627
    %659 = vmatprep.subr.mxu0 0.0
    %660 = vmatpush1.msra.mxu0 %v628
    %661 = vmatprep.subr.mxu0 0.0
    %662 = vmatpush1.msra.mxu0 %v629
    %663 = vmatprep.subr.mxu0 0.0
    %664 = vmatpush1.msra.mxu0 %v630
    %665 = vmatprep.subr.mxu0 0.0
    %666 = vmatpush1.msra.mxu0 %v631
    %667 = vmatprep.subr.mxu0 0.0
    %668 = vmatpush1.msra.mxu0 %v632
    %669 = vmatprep.subr.mxu0 0.0
    %670 = vmatpush1.msra.mxu0 %v633
    %671 = vmatprep.subr.mxu0 0.0
    %672 = vmatpush1.msra.mxu0 %v634
    %673 = vmatprep.subr.mxu0 0.0
    %674 = vmatpush1.msra.mxu0 %v635
    %675 = vmatprep.subr.mxu0 0.0
    %676 = vmatpush1.msra.mxu0 0.0
    %677 = vmatprep.subr.mxu0 0.0
    %678 = vmatpush1.msra.mxu0 0.0
    %679 = vmatprep.subr.mxu0 0.0
    %680 = vmatpush1.msra.mxu0 0.0
    %681 = vmatprep.subr.mxu0 0.0
    %682 = vmatpush1.msra.mxu0 0.0
    %683 = vmatprep.subr.mxu0 0.0
    %684 = vmatpush1.msra.mxu0 0.0
    %685 = vmatprep.subr.mxu0 0.0
    %686 = vmatpush1.msra.mxu0 0.0
    %687 = vmatprep.subr.mxu0 0.0
    %688 = vmatpush1.msra.mxu0 0.0
    %689 = vmatprep.subr.mxu0 0.0
    %690 = vmatpush1.msra.mxu0 0.0
    %691 = vmatprep.subr.mxu0 0.0
    %692 = vmatpush1.msra.mxu0 0.0
    %693 = vmatprep.subr.mxu0 0.0
    %694 = vmatpush1.msra.mxu0 0.0
    %695 = vmatprep.subr.mxu0 0.0
    %696 = vmatpush1.msra.mxu0 0.0
    %697 = vmatprep.subr.mxu0 0.0
    %698 = vmatpush1.msra.mxu0 0.0
    %699 = vmatprep.subr.mxu0 0.0
    %700 = vmatpush1.msra.mxu0 0.0
    %701 = vmatprep.subr.mxu0 0.0
    %702 = vmatpush1.msra.mxu0 0.0
    %703 = vmatprep.subr.mxu0 0.0
    %704 = vmatpush1.msra.mxu0 0.0
    %705 = vmatprep.subr.mxu0 0.0
    %706 = vmatpush1.msra.mxu0 0.0
    %707 = vmatprep.mubr.f32.mxu0 0.0
    %708 = vmatmul.mubr.f32.gmra.mrb[0].mxu0 %v619
    %v709 = vpop.f32.mrb[0].mxu0
    %v710 = vadd.f32 %v641, %v709
    %v711 = vpop.f32.mrb[0].mxu0
    %712 = vdwg.mxu0
    %713 = vst [vmem:[#allocation8] sm:$0xff] %v710
    %714 = vst [vmem:[%s10] sm:$0xff] %v619
    // Predicated region
    $region50: #{inspire_rnn_agent_forward.1} parent=1 // pred_check
      _
    $region51: #{inspire_rnn_agent_forward.1} parent=1 // pred_check_branch
      %716 = sbr.rel (0) target = $region53
    $region52: #{inspire_rnn_agent_forward.1} parent=1 // pred_region
      %s718 = ssub.s32 128, 128
      %719 = vsyncadd [#allocation4], %s718
      %s721 = sshll.u32 [#allocation8], 4
      %s722 = int_to_ptr.vmem [resolvable:$true] %s721
      %724 = dma.vmem_to_hbm [thread:$0]  %s722, 128, %s9, [#allocation4]
    $region53: #{inspire_rnn_agent_forward.1} parent=1 // pred_fallthru
      _
    // Predicated region
    $region54: #{inspire_rnn_agent_forward.1} parent=1 // pred_check
      _
    $region55: #{inspire_rnn_agent_forward.1} parent=1 // pred_check_branch
      %726 = sbr.rel (0) target = $region57
    $region56: #{inspire_rnn_agent_forward.1} parent=1 // pred_region
      _
    $region57: #{inspire_rnn_agent_forward.1} parent=1 // pred_fallthru
      _
    // Predicated region
    $region58: #{inspire_rnn_agent_forward.1} parent=1 // pred_check
      _
    $region59: #{inspire_rnn_agent_forward.1} parent=1 // pred_check_branch
      %728 = sbr.rel (0) target = $region61
    $region60: #{inspire_rnn_agent_forward.1} parent=1 // pred_region
      %729 = dma.done [#allocation4], 128
    $region61: #{inspire_rnn_agent_forward.1} parent=1 // pred_fallthru
      _
    // Predicated region
    $region62: #{inspire_rnn_agent_forward.1} parent=1 // pred_check
      _
    $region63: #{inspire_rnn_agent_forward.1} parent=1 // pred_check_branch
      %731 = sbr.rel (0) target = $region65
    $region64: #{inspire_rnn_agent_forward.1} parent=1 // pred_region
      _
    $region65: #{inspire_rnn_agent_forward.1} parent=1 // pred_fallthru
      _
    %732 = vsyncpa [#allocation3], 1
    %733 = vsyncpa [#allocation6], 1
    %734 = vsyncpa [#allocation4], 1

</llo_original>
